<compile_context>
chip_gen: v6e
topology: v6e:2x2x1
jax: 0.10.0
libtpu: 0.0.40
codegen_flags: <defaults>
</compile_context>

<pallas_src>
import math
import functools

import jax
import jax.numpy as jnp
from jax import lax
from jax.experimental import pallas as pl
from jax.experimental.pallas import tpu as pltpu

LN_EPS = 1e-5
NEG_INF = -1e30                       # finite large-negative mask (no -inf NaN hazard)
VMEM_LIMIT = 48 * 1024 * 1024         # explicit scoped-VMEM budget (fits v5e/v6e/v7x)


def _layernorm(x, w, b):
    mu = jnp.mean(x, axis=-1, keepdims=True)
    var = jnp.mean((x - mu) ** 2, axis=-1, keepdims=True)
    return (x - mu) * lax.rsqrt(var + LN_EPS) * w + b


def _gelu_exact(x):
    # nn.GELU() default: exact erf-based GELU
    return 0.5 * x * (1.0 + lax.erf(x * (1.0 / math.sqrt(2.0))))


# ---------------------------------------------------------------------------
# Stage 1: LayerNorm1 + fused QKV projection
# ---------------------------------------------------------------------------
def qkv_kernel(x_ref, ln1w_ref, ln1b_ref, wqkv_ref, bqkv_ref, q_ref, k_ref, v_ref):
    C = x_ref.shape[2]
    x = x_ref[0]                                                   # (tq, C) f32
    h = _layernorm(x, ln1w_ref[0], ln1b_ref[0]).astype(jnp.bfloat16)
    qkv = jnp.dot(h, wqkv_ref[...], preferred_element_type=jnp.float32) + bqkv_ref[0]
    qkv = qkv.astype(jnp.bfloat16)                                 # (tq, 3C)
    q_ref[0] = qkv[:, :C]
    k_ref[0] = qkv[:, C:2 * C]
    v_ref[0] = qkv[:, 2 * C:]


# ---------------------------------------------------------------------------
# Stage 2: flash-style causal attention (online softmax over key tiles)
# ---------------------------------------------------------------------------
def attn_kernel(q_ref, k_ref, v_ref, o_ref, m_s, l_s, acc_s, *, n_head):
    tq = q_ref.shape[1]
    tk = k_ref.shape[1]
    C = q_ref.shape[2]
    D = C // n_head
    scale = 1.0 / math.sqrt(D)

    qi = pl.program_id(1)
    kj = pl.program_id(2)
    nk = pl.num_programs(2)

    @pl.when(kj == 0)
    def _init():
        m_s[...] = jnp.full(m_s.shape, NEG_INF, m_s.dtype)
        l_s[...] = jnp.zeros(l_s.shape, l_s.dtype)
        acc_s[...] = jnp.zeros(acc_s.shape, acc_s.dtype)

    # Skip key tiles that lie entirely above the causal diagonal.
    @pl.when(kj * tk < (qi + 1) * tq)
    def _compute():
        q = q_ref[0]                                               # (tq, C) bf16
        k = k_ref[0]                                               # (tk, C) bf16
        v = v_ref[0]                                               # (tk, C) bf16

        # Tile-local causal mask as an additive bias (built once, shared by heads).
        rows = qi * tq + lax.broadcasted_iota(jnp.int32, (tq, tk), 0)
        cols = kj * tk + lax.broadcasted_iota(jnp.int32, (tq, tk), 1)
        bias = jnp.where(cols <= rows, 0.0, NEG_INF).astype(jnp.float32)

        m_prev = m_s[...]
        l_prev = l_s[...]
        acc_prev = acc_s[...]

        m_parts, l_parts, acc_parts = [], [], []
        for h in range(n_head):                                    # static unroll
            lo, hi = h * D, (h + 1) * D
            qh = q[:, lo:hi]                                       # (tq, D) bf16
            kh = k[:, lo:hi]                                       # (tk, D) bf16
            vh = v[:, lo:hi]                                       # (tk, D) bf16

            # scores: q @ k^T (contract last dims), f32 accumulation on the MXU
            s = lax.dot_general(qh, kh, (((1,), (1,)), ((), ())),
                                preferred_element_type=jnp.float32)
            s = s * scale + bias                                   # (tq, tk) f32

            m_old = m_prev[:, lo:lo + 1]                           # (tq, 1) replicated
            l_old = l_prev[:, lo:lo + 1]
            m_new = jnp.maximum(m_old, jnp.max(s, axis=-1, keepdims=True))
            alpha = jnp.exp(m_old - m_new)
            p = jnp.exp(s - m_new)
            l_new = alpha * l_old + jnp.sum(p, axis=-1, keepdims=True)

            pv = lax.dot_general(p.astype(jnp.bfloat16), vh,
                                 (((1,), (0,)), ((), ())),
                                 preferred_element_type=jnp.float32)
            acc_parts.append(alpha * acc_prev[:, lo:hi] + pv)
            m_parts.append(jnp.broadcast_to(m_new, (tq, D)))
            l_parts.append(jnp.broadcast_to(l_new, (tq, D)))

        acc_s[...] = jnp.concatenate(acc_parts, axis=1)            # full-width stores
        m_s[...] = jnp.concatenate(m_parts, axis=1)
        l_s[...] = jnp.concatenate(l_parts, axis=1)

    @pl.when(kj == nk - 1)
    def _finalize():
        y = acc_s[...] * pl.reciprocal(l_s[...], approx=True)
        o_ref[0] = y.astype(o_ref.dtype)


# ---------------------------------------------------------------------------
# Stage 3: attention proj + residual1 + LayerNorm2 + MLP (hidden-dim streamed) + residual2
# ---------------------------------------------------------------------------
def proj_mlp_kernel(x_ref, y_ref, wp_ref, bp_ref, ln2w_ref, ln2b_ref,
                    w1_ref, b1_ref, w2_ref, b2_ref, o_ref,
                    x1_s, h2_s, acc_s):
    f = pl.program_id(2)
    nf = pl.num_programs(2)

    @pl.when(f == 0)
    def _init():
        yp = jnp.dot(y_ref[0], wp_ref[...],
                     preferred_element_type=jnp.float32) + bp_ref[0]
        x1 = x_ref[0] + yp                                         # residual 1 (f32)
        x1_s[...] = x1
        h2_s[...] = _layernorm(x1, ln2w_ref[0], ln2b_ref[0]).astype(jnp.bfloat16)
        acc_s[...] = jnp.zeros(acc_s.shape, acc_s.dtype)

    # One hidden-dim chunk of the MLP: gelu(h2 @ W1[:, f]) @ W2[f, :]
    ff = jnp.dot(h2_s[...], w1_ref[...],
                 preferred_element_type=jnp.float32) + b1_ref[0]
    ff = _gelu_exact(ff)
    acc_s[...] += jnp.dot(ff.astype(jnp.bfloat16), w2_ref[...],
                          preferred_element_type=jnp.float32)

    @pl.when(f == nf - 1)
    def _finalize():
        o_ref[0] = x1_s[...] + acc_s[...] + b2_ref[0]              # residual 2 (f32)


# ---------------------------------------------------------------------------
# Wrapper
# ---------------------------------------------------------------------------
def block_forward(x, params, *, n_head, tq=None, tk=None, tf=None):
    """x: (B, T, C) float32.  params: dict of weights (see init_params)."""
    B, T, C = x.shape
    Hd = 4 * C
    if tq is None:
        tq = min(T, 128)   # bump to 256 on v6e/v7x for wider MXU fill
    if tk is None:
        tk = min(T, 128)
    if tf is None:
        tf = min(Hd, 512)
    assert T % tq == 0 and T % tk == 0 and Hd % tf == 0 and C % n_head == 0
    nq, nk, nf = T // tq, T // tk, Hd // tf

    bf16 = jnp.bfloat16
    f32 = jnp.float32

    # bf16 weights (f32 accumulation inside kernels); fused QKV weight/bias.
    wqkv = jnp.concatenate([params["wq"], params["wk"], params["wv"]], axis=1).astype(bf16)
    bqkv = jnp.concatenate([params["bq"], params["bk"], params["bv"]], axis=1).astype(f32)
    wp = params["wp"].astype(bf16)
    w1 = params["w1"].astype(bf16)
    w2 = params["w2"].astype(bf16)

    cp2 = pltpu.CompilerParams(dimension_semantics=("parallel", "parallel"),
                               vmem_limit_bytes=VMEM_LIMIT)
    cp3 = pltpu.CompilerParams(dimension_semantics=("parallel", "parallel", "arbitrary"),
                               vmem_limit_bytes=VMEM_LIMIT)

    # ---- Stage 1: LN1 + QKV ----
    q, k, v = pl.pallas_call(
        qkv_kernel,
        out_shape=(jax.ShapeDtypeStruct((B, T, C), bf16),
                   jax.ShapeDtypeStruct((B, T, C), bf16),
                   jax.ShapeDtypeStruct((B, T, C), bf16)),
        grid_spec=pltpu.PrefetchScalarGridSpec(
            num_scalar_prefetch=0, grid=(B, nq),
            in_specs=[
                pl.BlockSpec((1, tq, C), lambda b, i: (b, i, 0)),
                pl.BlockSpec((1, C), lambda b, i: (0, 0)),
                pl.BlockSpec((1, C), lambda b, i: (0, 0)),
                pl.BlockSpec((C, 3 * C), lambda b, i: (0, 0)),
                pl.BlockSpec((1, 3 * C), lambda b, i: (0, 0)),
            ],
            out_specs=(pl.BlockSpec((1, tq, C), lambda b, i: (b, i, 0)),
                       pl.BlockSpec((1, tq, C), lambda b, i: (b, i, 0)),
                       pl.BlockSpec((1, tq, C), lambda b, i: (b, i, 0))),
        ),
        compiler_params=cp2,
    )(x, params["ln1_w"], params["ln1_b"], wqkv, bqkv)

    # ---- Stage 2: flash causal attention ----
    y = pl.pallas_call(
        functools.partial(attn_kernel, n_head=n_head),
        out_shape=jax.ShapeDtypeStruct((B, T, C), bf16),
        grid_spec=pltpu.PrefetchScalarGridSpec(
            num_scalar_prefetch=0, grid=(B, nq, nk),
            in_specs=[
                pl.BlockSpec((1, tq, C), lambda b, i, j: (b, i, 0)),
                pl.BlockSpec((1, tk, C), lambda b, i, j: (b, j, 0)),
                pl.BlockSpec((1, tk, C), lambda b, i, j: (b, j, 0)),
            ],
            out_specs=pl.BlockSpec((1, tq, C), lambda b, i, j: (b, i, 0)),
            scratch_shapes=[
                pltpu.VMEM((tq, C), f32),   # running max (replicated per head cols)
                pltpu.VMEM((tq, C), f32),   # running denom
                pltpu.VMEM((tq, C), f32),   # output accumulator
            ],
        ),
        compiler_params=cp3,
    )(q, k, v)

    # ---- Stage 3: proj + residual + LN2 + MLP (streamed hidden dim) ----
    out = pl.pallas_call(
        proj_mlp_kernel,
        out_shape=jax.ShapeDtypeStruct((B, T, C), f32),
        grid_spec=pltpu.PrefetchScalarGridSpec(
            num_scalar_prefetch=0, grid=(B, nq, nf),
            in_specs=[
                pl.BlockSpec((1, tq, C), lambda b, i, f: (b, i, 0)),   # x
                pl.BlockSpec((1, tq, C), lambda b, i, f: (b, i, 0)),   # attn out
                pl.BlockSpec((C, C), lambda b, i, f: (0, 0)),          # wp
                pl.BlockSpec((1, C), lambda b, i, f: (0, 0)),          # bp
                pl.BlockSpec((1, C), lambda b, i, f: (0, 0)),          # ln2 w
                pl.BlockSpec((1, C), lambda b, i, f: (0, 0)),          # ln2 b
                pl.BlockSpec((C, tf), lambda b, i, f: (0, f)),         # w1 chunk
                pl.BlockSpec((1, tf), lambda b, i, f: (0, f)),         # b1 chunk
                pl.BlockSpec((tf, C), lambda b, i, f: (f, 0)),         # w2 chunk
                pl.BlockSpec((1, C), lambda b, i, f: (0, 0)),          # b2
            ],
            out_specs=pl.BlockSpec((1, tq, C), lambda b, i, f: (b, i, 0)),
            scratch_shapes=[
                pltpu.VMEM((tq, C), f32),    # x1 (residual 1)
                pltpu.VMEM((tq, C), bf16),   # LN2 output
                pltpu.VMEM((tq, C), f32),    # MLP accumulator
            ],
        ),
        compiler_params=cp3,
    )(x, y, wp, params["bp"], params["ln2_w"], params["ln2_b"],
      w1, params["b1"], w2, params["b2"])

    return out


def init_params(key, n_embd):
    """Deterministic synthetic parameters.  Linear weights stored as (in, out)
    so kernels do x @ W + b (equivalent to PyTorch's x @ weight.T + bias)."""
    C = n_embd
    Hd = 4 * C
    keys = jax.random.split(key, 8)
    s = 0.02
    return {
        "ln1_w": jnp.ones((1, C), jnp.float32),
        "ln1_b": jnp.zeros((1, C), jnp.float32),
        "wq": s * jax.random.normal(keys[0], (C, C), jnp.float32),
        "bq": jnp.zeros((1, C), jnp.float32),
        "wk": s * jax.random.normal(keys[1], (C, C), jnp.float32),
        "bk": jnp.zeros((1, C), jnp.float32),
        "wv": s * jax.random.normal(keys[2], (C, C), jnp.float32),
        "bv": jnp.zeros((1, C), jnp.float32),
        "wp": s * jax.random.normal(keys[3], (C, C), jnp.float32),
        "bp": jnp.zeros((1, C), jnp.float32),
        "ln2_w": jnp.ones((1, C), jnp.float32),
        "ln2_b": jnp.zeros((1, C), jnp.float32),
        "w1": s * jax.random.normal(keys[4], (C, Hd), jnp.float32),
        "b1": jnp.zeros((1, Hd), jnp.float32),
        "w2": s * jax.random.normal(keys[5], (Hd, C), jnp.float32),
        "b2": jnp.zeros((1, C), jnp.float32),
    }


def block_forward_ref(x, params, *, n_head):
    """Pure-JAX f32 reference of the same forward pass (for sanity checking)."""
    B, T, C = x.shape
    D = C // n_head
    prec = lax.Precision.HIGHEST

    def ln(v, w, b):
        mu = jnp.mean(v, axis=-1, keepdims=True)
        var = jnp.mean((v - mu) ** 2, axis=-1, keepdims=True)
        return (v - mu) * lax.rsqrt(var + LN_EPS) * w[0] + b[0]

    h = ln(x, params["ln1_w"], params["ln1_b"])
    q = jnp.einsum('btc,cd->btd', h, params["wq"], precision=prec) + params["bq"][0]
    k = jnp.einsum('btc,cd->btd', h, params["wk"], precision=prec) + params["bk"][0]
    v = jnp.einsum('btc,cd->btd', h, params["wv"], precision=prec) + params["bv"][0]
    q = q.reshape(B, T, n_head, D).transpose(0, 2, 1, 3)
    k = k.reshape(B, T, n_head, D).transpose(0, 2, 1, 3)
    v = v.reshape(B, T, n_head, D).transpose(0, 2, 1, 3)
    att = jnp.einsum('bhtd,bhsd->bhts', q, k, precision=prec) / math.sqrt(D)
    mask = jnp.tril(jnp.ones((T, T), bool))[None, None]
    att = jnp.where(mask, att, -jnp.inf)
    att = jax.nn.softmax(att, axis=-1)
    y = jnp.einsum('bhts,bhsd->bhtd', att, v, precision=prec)
    y = y.transpose(0, 2, 1, 3).reshape(B, T, C)
    y = jnp.einsum('btc,cd->btd', y, params["wp"], precision=prec) + params["bp"][0]
    x1 = x + y
    h2 = ln(x1, params["ln2_w"], params["ln2_b"])
    ff = jnp.einsum('btc,cd->btd', h2, params["w1"], precision=prec) + params["b1"][0]
    ff = 0.5 * ff * (1.0 + lax.erf(ff / math.sqrt(2.0)))
    ff = jnp.einsum('btc,cd->btd', ff, params["w2"], precision=prec) + params["b2"][0]
    return x1 + ff


if __name__ == "__main__":
    # Small config (lane-dense C): block_size (seq) = 16, n_embd = 128, n_head = 4
    B, T, C, n_head = 2, 16, 128, 4

    key = jax.random.PRNGKey(0)
    kx, kp = jax.random.split(key)
    x = jax.random.normal(kx, (B, T, C), jnp.float32)
    params = init_params(kp, C)

    out = jax.block_until_ready(block_forward(x, params, n_head=n_head))
    ref = jax.block_until_ready(block_forward_ref(x, params, n_head=n_head))

    assert out.shape == (B, T, C)
    err = float(jnp.max(jnp.abs(out - ref)))
    # bf16 matmul inputs with f32 accumulation -> loosened tolerance vs f32 reference.
    assert jnp.allclose(out, ref, atol=2e-2, rtol=2e-2), err

    print("KERNEL_OK")
</pallas_src>

<mosaic_0001>
module attributes {stable_mosaic.version = 11 : i64} {
  func.func @qkv_kernel(%arg0: i32, %arg1: i32, %arg2: memref<1x16x128xf32, #tpu.memory_space<vmem>>, %arg3: memref<1x128xf32, #tpu.memory_space<vmem>>, %arg4: memref<1x128xf32, #tpu.memory_space<vmem>>, %arg5: memref<128x384xbf16, #tpu.memory_space<vmem>>, %arg6: memref<1x384xf32, #tpu.memory_space<vmem>>, %arg7: memref<1x16x128xbf16, #tpu.memory_space<vmem>>, %arg8: memref<1x16x128xbf16, #tpu.memory_space<vmem>>, %arg9: memref<1x16x128xbf16, #tpu.memory_space<vmem>>) attributes {dimension_semantics = [#tpu.dimension_semantics<parallel>, #tpu.dimension_semantics<parallel>], iteration_bounds = array<i64: 2, 1>, scalar_prefetch = 0 : i64, scratch_operands = 0 : i64, tpu.core_type = #tpu.core_type<tc>, window_params = [{transform_indices = @transform_0, window_bounds = array<i64: 1, 16, 128>}, {pipeline_mode = #tpu.pipeline_mode<synchronous>, transform_indices = @transform_1, window_bounds = array<i64: 1, 128>}, {pipeline_mode = #tpu.pipeline_mode<synchronous>, transform_indices = @transform_2, window_bounds = array<i64: 1, 128>}, {pipeline_mode = #tpu.pipeline_mode<synchronous>, transform_indices = @transform_3, window_bounds = array<i64: 128, 384>}, {pipeline_mode = #tpu.pipeline_mode<synchronous>, transform_indices = @transform_4, window_bounds = array<i64: 1, 384>}, {transform_indices = @transform_5, window_bounds = array<i64: 1, 16, 128>}, {transform_indices = @transform_6, window_bounds = array<i64: 1, 16, 128>}, {transform_indices = @transform_7, window_bounds = array<i64: 1, 16, 128>}]} {
    %c0 = arith.constant 0 : index
    %c0_0 = arith.constant 0 : index
    %c0_1 = arith.constant 0 : index
    %0 = vector.load %arg2[%c0, %c0_0, %c0_1] : memref<1x16x128xf32, #tpu.memory_space<vmem>>, vector<1x16x128xf32>
    %1 = vector.shape_cast %0 : vector<1x16x128xf32> to vector<16x128xf32>
    %c0_2 = arith.constant 0 : index
    %c0_3 = arith.constant 0 : index
    %2 = vector.load %arg3[%c0_2, %c0_3] : memref<1x128xf32, #tpu.memory_space<vmem>>, vector<1x128xf32>
    %3 = vector.shape_cast %2 : vector<1x128xf32> to vector<128xf32>
    %c0_4 = arith.constant 0 : index
    %c0_5 = arith.constant 0 : index
    %4 = vector.load %arg4[%c0_4, %c0_5] : memref<1x128xf32, #tpu.memory_space<vmem>>, vector<1x128xf32>
    %5 = vector.shape_cast %4 : vector<1x128xf32> to vector<128xf32>
    %cst = arith.constant dense<0.000000e+00> : vector<16xf32>
    %6 = vector.multi_reduction <add>, %1, %cst [1] : vector<16x128xf32> to vector<16xf32>
    %7 = vector.shape_cast %6 : vector<16xf32> to vector<16x1xf32>
    %cst_6 = arith.constant 1.280000e+02 : f32
    %8 = vector.broadcast %cst_6 : f32 to vector<16x1xf32>
    %9 = arith.divf %7, %8 : vector<16x1xf32>
    %10 = vector.broadcast %9 : vector<16x1xf32> to vector<16x128xf32>
    %11 = arith.subf %1, %10 : vector<16x128xf32>
    %12 = arith.mulf %11, %11 : vector<16x128xf32>
    %cst_7 = arith.constant dense<0.000000e+00> : vector<16xf32>
    %13 = vector.multi_reduction <add>, %12, %cst_7 [1] : vector<16x128xf32> to vector<16xf32>
    %14 = vector.shape_cast %13 : vector<16xf32> to vector<16x1xf32>
    %cst_8 = arith.constant 1.280000e+02 : f32
    %15 = vector.broadcast %cst_8 : f32 to vector<16x1xf32>
    %16 = arith.divf %14, %15 : vector<16x1xf32>
    %17 = vector.broadcast %9 : vector<16x1xf32> to vector<16x128xf32>
    %18 = arith.subf %1, %17 : vector<16x128xf32>
    %cst_9 = arith.constant 9.99999974E-6 : f32
    %19 = vector.broadcast %cst_9 : f32 to vector<16x1xf32>
    %20 = arith.addf %16, %19 : vector<16x1xf32>
    %21 = math.rsqrt %20 : vector<16x1xf32>
    %22 = vector.broadcast %21 : vector<16x1xf32> to vector<16x128xf32>
    %23 = arith.mulf %18, %22 : vector<16x128xf32>
    %24 = vector.shape_cast %3 : vector<128xf32> to vector<1x128xf32>
    %25 = vector.broadcast %24 : vector<1x128xf32> to vector<16x128xf32>
    %26 = arith.mulf %23, %25 : vector<16x128xf32>
    %27 = vector.shape_cast %5 : vector<128xf32> to vector<1x128xf32>
    %28 = vector.broadcast %27 : vector<1x128xf32> to vector<16x128xf32>
    %29 = arith.addf %26, %28 : vector<16x128xf32>
    %30 = arith.truncf %29 : vector<16x128xf32> to vector<16x128xbf16>
    %c0_10 = arith.constant 0 : index
    %c0_11 = arith.constant 0 : index
    %31 = vector.load %arg5[%c0_10, %c0_11] : memref<128x384xbf16, #tpu.memory_space<vmem>>, vector<128x384xbf16>
    %cst_12 = arith.constant dense<0.000000e+00> : vector<16x384xf32>
    %32 = tpu.matmul %30, %31, %cst_12 {dimension_numbers = #tpu.dot_dimension_numbers<[1], [0], [0], [1], [0, 0, 1, 1], [], []>} : vector<16x128xbf16>, vector<128x384xbf16>, vector<16x384xf32> -> vector<16x384xf32>
    %c0_13 = arith.constant 0 : index
    %c0_14 = arith.constant 0 : index
    %33 = vector.load %arg6[%c0_13, %c0_14] : memref<1x384xf32, #tpu.memory_space<vmem>>, vector<1x384xf32>
    %34 = vector.shape_cast %33 : vector<1x384xf32> to vector<384xf32>
    %35 = vector.shape_cast %34 : vector<384xf32> to vector<1x384xf32>
    %36 = vector.broadcast %35 : vector<1x384xf32> to vector<16x384xf32>
    %37 = arith.addf %32, %36 : vector<16x384xf32>
    %38 = arith.truncf %37 : vector<16x384xf32> to vector<16x384xbf16>
    %39 = vector.extract_strided_slice %38 {offsets = [0, 0], sizes = [16, 128], strides = [1, 1]} : vector<16x384xbf16> to vector<16x128xbf16>
    %c0_15 = arith.constant 0 : index
    %c0_16 = arith.constant 0 : index
    %c0_17 = arith.constant 0 : index
    %40 = vector.load %arg7[%c0_15, %c0_16, %c0_17] : memref<1x16x128xbf16, #tpu.memory_space<vmem>>, vector<1x16x128xbf16>
    %41 = vector.shape_cast %40 : vector<1x16x128xbf16> to vector<16x128xbf16>
    %42 = vector.shape_cast %39 : vector<16x128xbf16> to vector<1x16x128xbf16>
    tpu.vector_store %arg7[%c0_15, %c0_16, %c0_17], %42 {strides = array<i32>} : memref<1x16x128xbf16, #tpu.memory_space<vmem>>, vector<1x16x128xbf16>,
    %43 = vector.extract_strided_slice %38 {offsets = [0, 128], sizes = [16, 128], strides = [1, 1]} : vector<16x384xbf16> to vector<16x128xbf16>
    %c0_18 = arith.constant 0 : index
    %c0_19 = arith.constant 0 : index
    %c0_20 = arith.constant 0 : index
    %44 = vector.load %arg8[%c0_18, %c0_19, %c0_20] : memref<1x16x128xbf16, #tpu.memory_space<vmem>>, vector<1x16x128xbf16>
    %45 = vector.shape_cast %44 : vector<1x16x128xbf16> to vector<16x128xbf16>
    %46 = vector.shape_cast %43 : vector<16x128xbf16> to vector<1x16x128xbf16>
    tpu.vector_store %arg8[%c0_18, %c0_19, %c0_20], %46 {strides = array<i32>} : memref<1x16x128xbf16, #tpu.memory_space<vmem>>, vector<1x16x128xbf16>,
    %47 = vector.extract_strided_slice %38 {offsets = [0, 256], sizes = [16, 128], strides = [1, 1]} : vector<16x384xbf16> to vector<16x128xbf16>
    %c0_21 = arith.constant 0 : index
    %c0_22 = arith.constant 0 : index
    %c0_23 = arith.constant 0 : index
    %48 = vector.load %arg9[%c0_21, %c0_22, %c0_23] : memref<1x16x128xbf16, #tpu.memory_space<vmem>>, vector<1x16x128xbf16>
    %49 = vector.shape_cast %48 : vector<1x16x128xbf16> to vector<16x128xbf16>
    %50 = vector.shape_cast %47 : vector<16x128xbf16> to vector<1x16x128xbf16>
    tpu.vector_store %arg9[%c0_21, %c0_22, %c0_23], %50 {strides = array<i32>} : memref<1x16x128xbf16, #tpu.memory_space<vmem>>, vector<1x16x128xbf16>,
    return
  }
  func.func @transform_0(%arg0: i32, %arg1: i32) -> (i32, i32, i32) {
    %c0_i32 = arith.constant 0 : i32
    %c0_i32_0 = arith.constant 0 : i32
    return %arg0, %arg1, %c0_i32 : i32, i32, i32
  }
  func.func @transform_1(%arg0: i32, %arg1: i32) -> (i32, i32) {
    %c0_i32 = arith.constant 0 : i32
    %c0_i32_0 = arith.constant 0 : i32
    %c0_i32_1 = arith.constant 0 : i32
    return %c0_i32, %c0_i32_0 : i32, i32
  }
  func.func @transform_2(%arg0: i32, %arg1: i32) -> (i32, i32) {
    %c0_i32 = arith.constant 0 : i32
    %c0_i32_0 = arith.constant 0 : i32
    %c0_i32_1 = arith.constant 0 : i32
    return %c0_i32, %c0_i32_0 : i32, i32
  }
  func.func @transform_3(%arg0: i32, %arg1: i32) -> (i32, i32) {
    %c0_i32 = arith.constant 0 : i32
    %c0_i32_0 = arith.constant 0 : i32
    %c0_i32_1 = arith.constant 0 : i32
    return %c0_i32, %c0_i32_0 : i32, i32
  }
  func.func @transform_4(%arg0: i32, %arg1: i32) -> (i32, i32) {
    %c0_i32 = arith.constant 0 : i32
    %c0_i32_0 = arith.constant 0 : i32
    %c0_i32_1 = arith.constant 0 : i32
    return %c0_i32, %c0_i32_0 : i32, i32
  }
  func.func @transform_5(%arg0: i32, %arg1: i32) -> (i32, i32, i32) {
    %c0_i32 = arith.constant 0 : i32
    %c0_i32_0 = arith.constant 0 : i32
    return %arg0, %arg1, %c0_i32 : i32, i32, i32
  }
  func.func @transform_6(%arg0: i32, %arg1: i32) -> (i32, i32, i32) {
    %c0_i32 = arith.constant 0 : i32
    %c0_i32_0 = arith.constant 0 : i32
    return %arg0, %arg1, %c0_i32 : i32, i32, i32
  }
  func.func @transform_7(%arg0: i32, %arg1: i32) -> (i32, i32, i32) {
    %c0_i32 = arith.constant 0 : i32
    %c0_i32_0 = arith.constant 0 : i32
    return %arg0, %arg1, %c0_i32 : i32, i32, i32
  }
}

</mosaic_0001>

<llo_original>
// kernel: tpu_custom_call.1
$region0: #{tpu_custom_call.1}
  #allocation0 [shape = 'u32[]', space=smem, size = 0x4, offset = 0x4, fixed_abs, tag = 'smem constant byte address 0x4 - core index']
  #allocation1 [shape = 'u32[144,128]{1,0:T(1,128)}', space=vmem, size = 0x12000, scoped, tag = 'internal scratch']
  %s0 = inlined_call_operand.hbm [shape: f32[2,16,128], index: 0, kind: input, shape index: {}]
  %s1 = inlined_call_operand.vmem [shape: f32[1,128], index: 1, kind: input, shape index: {}]
  %s2 = inlined_call_operand.vmem [shape: f32[1,128], index: 2, kind: input, shape index: {}]
  %s3 = inlined_call_operand.hbm [shape: bf16[128,384], index: 3, kind: input, shape index: {}]
  %s4 = inlined_call_operand.vmem [shape: f32[1,384], index: 4, kind: input, shape index: {}]
  %s5 = inlined_call_operand.hbm [shape: bf16[2,16,128], index: 5, kind: output, shape index: {0}]
  %s6 = inlined_call_operand.hbm [shape: bf16[2,16,128], index: 6, kind: output, shape index: {1}]
  %s7 = inlined_call_operand.hbm [shape: bf16[2,16,128], index: 7, kind: output, shape index: {2}]
  %8 = xla_tuple %s5, %s6, %s7
  %s9 = sld [smem:[#allocation0]]
  $region77: #{tpu_custom_call.1} parent=0
    _
  %s11 = ssub.s32 1, %s9
  %s12 = scalar_select 0, %s11, %s9
  $region1: #{tpu_custom_call.1} parent=0
    #allocation2 [shape = 'u8[16384]{0}', space=vmem, size = 0x4000, scoped, tag = 'input window, operand 0']
    #allocation3 [shape = 's32[2]{0}', space=sflag, size = 0x8, scoped, tag = 'scoped memory for tpu_custom_call.1']
    #allocation4 [shape = 's32[2]{0}', space=sflag, size = 0x8, scoped, tag = 'scoped memory for tpu_custom_call.1']
    #allocation5 [shape = 'u8[98304]{0}', space=vmem, size = 0x18000, scoped, tag = 'input window, operand 3, single buffered']
    #allocation6 [shape = 's32[1]{0}', space=sflag, size = 0x4, scoped, tag = 'scoped memory for tpu_custom_call.1']
    #allocation7 [shape = 'u8[8192]{0}', space=vmem, size = 0x2000, scoped, tag = 'output window, operand 0']
    #allocation8 [shape = 'u8[8192]{0}', space=vmem, size = 0x2000, scoped, tag = 'output window, operand 1']
    #allocation9 [shape = 's32[2]{0}', space=sflag, size = 0x8, scoped, tag = 'scoped memory for tpu_custom_call.1']
    #allocation10 [shape = 'u8[8192]{0}', space=vmem, size = 0x2000, scoped, tag = 'output window, operand 2']
    %13 = vsyncpa [#allocation3], 0
    %s14 = scalar_lea.sflag [#allocation3], 1
    %15 = vsyncpa %s14, 0
    %16 = vsyncpa [#allocation6], 0
    %17 = vsyncpa [#allocation4], 0
    %s18 = scalar_lea.sflag [#allocation4], 1
    %19 = vsyncpa %s18, 0
    %20 = vsyncpa [#allocation9], 0
    %s21 = scalar_lea.sflag [#allocation9], 1
    %22 = vsyncpa %s21, 0
    loop: start=0, step=1, limit=4
    $region2: #{tpu_custom_call.1} parent=1 // loop_pre_header
      _
    $region3: #{tpu_custom_call.1} parent=1 // loop_header
      %s24 = sphi 0, %s28
      %p25 = scmp.ge.s32.totalorder %s24, 4
      %s31 = sphi 0, %s43
      %s32 = sphi 0, %s39
      %s33 = sphi 0, %s31
      %s34 = sphi 0, %s32
      %s35 = sphi 0, %s33
      %s36 = sphi 0, %s34
      %s48 = sphi 0, %s50
      %s51 = sphi 0, %s48
      %s52 = sphi 0, %s51
      %s68 = sphi 0, %s52
      %s72 = sphi 0, %s72
      %s74 = sphi 0, %s72
      %s75 = sphi 0, %s74
      %s89 = sphi 0, %s75
      %s93 = sphi 0, %s93
      %s95 = sphi 0, %s93
      %s96 = sphi 0, %s95
      %s110 = sphi 0, %s96
      %s114 = sphi 0, %s114
      %s116 = sphi 0, %s114
      %s117 = sphi 0, %s116
      %s131 = sphi 0, %s117
      %s135 = sphi 0, %s135
      %s137 = sphi 0, %s135
      %s138 = sphi 0, %s137
      %s152 = sphi 0, %s138
      %s160 = sphi 0, %s162
      %s163 = sphi 0, %s160
      %s164 = sphi 0, %s163
      %s180 = sphi 0, %s164
      %s188 = sphi 0, %s190
      %s191 = sphi 0, %s188
      %s192 = sphi 0, %s191
      %s208 = sphi 0, %s192
      %s216 = sphi 0, %s218
      %s219 = sphi 0, %s216
      %s220 = sphi 0, %s219
      %s236 = sphi 0, %s220
    $region4: #{tpu_custom_call.1} parent=1 // loop_header_branch
      %27 = sbr.rel (%p25) target = $region8
    $region5: #{tpu_custom_call.1} parent=1 // loop_body
      %s29 = ssub.s32 %s24, 1
      %s30 = ssub.s32 %s24, 2
      %s37 = sadd.s32 1, %s32
      %p38 = scmp.ge.s32.totalorder %s37, 1
      %s39 = scalar_select %p38, 0, %s37
      %s40 = sadd.s32 1, %s31
      %s41 = scalar_select %p38, %s40, %s31
      %p42 = scmp.ge.s32.totalorder %s41, 2
      %s43 = scalar_select %p42, 0, %s41
      %s44 = ssub.s32 %s31, %s43
      %s45 = ssub.s32 %s32, %s39
      %s46 = sor.u32 %s44, %s45
      %p47 = scmp.eq.s32.totalorder %s46, 0
      %s49 = sadd.s32 %s48, 1
      %s50 = scalar_select %p47, %s48, %s49
      %p53 = pneg %p47
      %p54 = scmp.eq.s32.totalorder %s24, 1
      %p55 = por %p53, %p54
      %p56 = scmp.ne.s32.totalorder %s48, %s51
      %p57 = scmp.eq.s32.totalorder %s24, 0
      %p58 = por %p56, %p57
      %p59 = scmp.ne.s32.totalorder %s48, %s51
      %p60 = scmp.eq.s32.totalorder %s29, 1
      %p61 = por %p59, %p60
      %p62 = scmp.ne.s32.totalorder %s51, %s52
      %p63 = scmp.eq.s32.totalorder %s29, 0
      %p64 = por %p62, %p63
      %p65 = scmp.ne.s32.totalorder %s51, %s52
      %p66 = scmp.eq.s32.totalorder %s30, 1
      %p67 = por %p65, %p66
      %p69 = scmp.ne.s32.totalorder %s52, %s68
      %p70 = scmp.eq.s32.totalorder %s30, 0
      %p71 = por %p69, %p70
      %s73 = sadd.s32 %s72, 1
      %p76 = scmp.eq.s32.totalorder %s24, 1
      %p77 = scmp.ne.s32.totalorder %s72, %s74
      %p78 = scmp.eq.s32.totalorder %s24, 0
      %p79 = por %p77, %p78
      %p80 = scmp.ne.s32.totalorder %s72, %s74
      %p81 = scmp.eq.s32.totalorder %s29, 1
      %p82 = por %p80, %p81
      %p83 = scmp.ne.s32.totalorder %s74, %s75
      %p84 = scmp.eq.s32.totalorder %s29, 0
      %p85 = por %p83, %p84
      %p86 = scmp.ne.s32.totalorder %s74, %s75
      %p87 = scmp.eq.s32.totalorder %s30, 1
      %p88 = por %p86, %p87
      %p90 = scmp.ne.s32.totalorder %s75, %s89
      %p91 = scmp.eq.s32.totalorder %s30, 0
      %p92 = por %p90, %p91
      %s94 = sadd.s32 %s93, 1
      %p97 = scmp.eq.s32.totalorder %s24, 1
      %p98 = scmp.ne.s32.totalorder %s93, %s95
      %p99 = scmp.eq.s32.totalorder %s24, 0
      %p100 = por %p98, %p99
      %p101 = scmp.ne.s32.totalorder %s93, %s95
      %p102 = scmp.eq.s32.totalorder %s29, 1
      %p103 = por %p101, %p102
      %p104 = scmp.ne.s32.totalorder %s95, %s96
      %p105 = scmp.eq.s32.totalorder %s29, 0
      %p106 = por %p104, %p105
      %p107 = scmp.ne.s32.totalorder %s95, %s96
      %p108 = scmp.eq.s32.totalorder %s30, 1
      %p109 = por %p107, %p108
      %p111 = scmp.ne.s32.totalorder %s96, %s110
      %p112 = scmp.eq.s32.totalorder %s30, 0
      %p113 = por %p111, %p112
      %s115 = sadd.s32 %s114, 1
      %p118 = scmp.eq.s32.totalorder %s24, 1
      %p119 = scmp.ne.s32.totalorder %s114, %s116
      %p120 = scmp.eq.s32.totalorder %s24, 0
      %p121 = por %p119, %p120
      %p122 = scmp.ne.s32.totalorder %s114, %s116
      %p123 = scmp.eq.s32.totalorder %s29, 1
      %p124 = por %p122, %p123
      %p125 = scmp.ne.s32.totalorder %s116, %s117
      %p126 = scmp.eq.s32.totalorder %s29, 0
      %p127 = por %p125, %p126
      %p128 = scmp.ne.s32.totalorder %s116, %s117
      %p129 = scmp.eq.s32.totalorder %s30, 1
      %p130 = por %p128, %p129
      %p132 = scmp.ne.s32.totalorder %s117, %s131
      %p133 = scmp.eq.s32.totalorder %s30, 0
      %p134 = por %p132, %p133
      %s136 = sadd.s32 %s135, 1
      %p139 = scmp.eq.s32.totalorder %s24, 1
      %p140 = scmp.ne.s32.totalorder %s135, %s137
      %p141 = scmp.eq.s32.totalorder %s24, 0
      %p142 = por %p140, %p141
      %p143 = scmp.ne.s32.totalorder %s135, %s137
      %p144 = scmp.eq.s32.totalorder %s29, 1
      %p145 = por %p143, %p144
      %p146 = scmp.ne.s32.totalorder %s137, %s138
      %p147 = scmp.eq.s32.totalorder %s29, 0
      %p148 = por %p146, %p147
      %p149 = scmp.ne.s32.totalorder %s137, %s138
      %p150 = scmp.eq.s32.totalorder %s30, 1
      %p151 = por %p149, %p150
      %p153 = scmp.ne.s32.totalorder %s138, %s152
      %p154 = scmp.eq.s32.totalorder %s30, 0
      %p155 = por %p153, %p154
      %s156 = ssub.s32 %s31, %s43
      %s157 = ssub.s32 %s32, %s39
      %s158 = sor.u32 %s156, %s157
      %p159 = scmp.eq.s32.totalorder %s158, 0
      %s161 = sadd.s32 %s160, 1
      %s162 = scalar_select %p159, %s160, %s161
      %p165 = pneg %p159
      %p166 = scmp.eq.s32.totalorder %s24, 1
      %p167 = por %p165, %p166
      %p168 = scmp.ne.s32.totalorder %s160, %s163
      %p169 = scmp.eq.s32.totalorder %s24, 0
      %p170 = por %p168, %p169
      %p171 = scmp.ne.s32.totalorder %s160, %s163
      %p172 = scmp.eq.s32.totalorder %s29, 1
      %p173 = por %p171, %p172
      %p174 = scmp.ne.s32.totalorder %s163, %s164
      %p175 = scmp.eq.s32.totalorder %s29, 0
      %p176 = por %p174, %p175
      %p177 = scmp.ne.s32.totalorder %s163, %s164
      %p178 = scmp.eq.s32.totalorder %s30, 1
      %p179 = por %p177, %p178
      %p181 = scmp.ne.s32.totalorder %s164, %s180
      %p182 = scmp.eq.s32.totalorder %s30, 0
      %p183 = por %p181, %p182
      %s184 = ssub.s32 %s31, %s43
      %s185 = ssub.s32 %s32, %s39
      %s186 = sor.u32 %s184, %s185
      %p187 = scmp.eq.s32.totalorder %s186, 0
      %s189 = sadd.s32 %s188, 1
      %s190 = scalar_select %p187, %s188, %s189
      %p193 = pneg %p187
      %p194 = scmp.eq.s32.totalorder %s24, 1
      %p195 = por %p193, %p194
      %p196 = scmp.ne.s32.totalorder %s188, %s191
      %p197 = scmp.eq.s32.totalorder %s24, 0
      %p198 = por %p196, %p197
      %p199 = scmp.ne.s32.totalorder %s188, %s191
      %p200 = scmp.eq.s32.totalorder %s29, 1
      %p201 = por %p199, %p200
      %p202 = scmp.ne.s32.totalorder %s191, %s192
      %p203 = scmp.eq.s32.totalorder %s29, 0
      %p204 = por %p202, %p203
      %p205 = scmp.ne.s32.totalorder %s191, %s192
      %p206 = scmp.eq.s32.totalorder %s30, 1
      %p207 = por %p205, %p206
      %p209 = scmp.ne.s32.totalorder %s192, %s208
      %p210 = scmp.eq.s32.totalorder %s30, 0
      %p211 = por %p209, %p210
      %s212 = ssub.s32 %s31, %s43
      %s213 = ssub.s32 %s32, %s39
      %s214 = sor.u32 %s212, %s213
      %p215 = scmp.eq.s32.totalorder %s214, 0
      %s217 = sadd.s32 %s216, 1
      %s218 = scalar_select %p215, %s216, %s217
      %p221 = pneg %p215
      %p222 = scmp.eq.s32.totalorder %s24, 1
      %p223 = por %p221, %p222
      %p224 = scmp.ne.s32.totalorder %s216, %s219
      %p225 = scmp.eq.s32.totalorder %s24, 0
      %p226 = por %p224, %p225
      %p227 = scmp.ne.s32.totalorder %s216, %s219
      %p228 = scmp.eq.s32.totalorder %s29, 1
      %p229 = por %p227, %p228
      %p230 = scmp.ne.s32.totalorder %s219, %s220
      %p231 = scmp.eq.s32.totalorder %s29, 0
      %p232 = por %p230, %p231
      %p233 = scmp.ne.s32.totalorder %s219, %s220
      %p234 = scmp.eq.s32.totalorder %s30, 1
      %p235 = por %p233, %p234
      %p237 = scmp.ne.s32.totalorder %s220, %s236
      %p238 = scmp.eq.s32.totalorder %s30, 0
      %p239 = por %p237, %p238
      %p240 = scmp.le.s32.totalorder 1, %s24
      %p241 = scmp.lt.s32.totalorder %s24, 3
      %p242 = pnand %p240, %p241
      %p243 = pneg %p242
      // Predicated region
      $region9: #{tpu_custom_call.1} parent=5 // pred_check
        _
      $region10: #{tpu_custom_call.1} parent=5 // pred_check_branch
        %245 = sbr.rel (%p242) target = $region12
      $region11: #{tpu_custom_call.1} parent=5 // pred_region
        %s246 = ssub.s32 %s24, 1
        // Predicated region
        $region13: #{tpu_custom_call.1} parent=11 // pred_check
          %p247 = pneg %p85
        $region14: #{tpu_custom_call.1} parent=11 // pred_check_branch
          %249 = sbr.rel (%p247) target = $region16
        $region15: #{tpu_custom_call.1} parent=11 // pred_region
          _
        $region16: #{tpu_custom_call.1} parent=11 // pred_fallthru
          _
        // Predicated region
        $region17: #{tpu_custom_call.1} parent=11 // pred_check
          %p250 = pneg %p106
        $region18: #{tpu_custom_call.1} parent=11 // pred_check_branch
          %252 = sbr.rel (%p250) target = $region20
        $region19: #{tpu_custom_call.1} parent=11 // pred_region
          _
        $region20: #{tpu_custom_call.1} parent=11 // pred_fallthru
          _
        // Predicated region
        $region21: #{tpu_custom_call.1} parent=11 // pred_check
          %p253 = pneg %p127
        $region22: #{tpu_custom_call.1} parent=11 // pred_check_branch
          %255 = sbr.rel (%p253) target = $region24
        $region23: #{tpu_custom_call.1} parent=11 // pred_region
          %s257 = ssub.s32 3072, 3072
          %258 = vsyncadd [#allocation6], %s257
          %s259 = sshll.u32 [#allocation5], 4
          %s260 = int_to_ptr.vmem [resolvable:$true] %s259
          %265 = dma.hbm_to_vmem [thread:$0]  %s3, 3072, %s260, [#allocation6], 192, 192, 12
        $region24: #{tpu_custom_call.1} parent=11 // pred_fallthru
          _
        // Predicated region
        $region25: #{tpu_custom_call.1} parent=11 // pred_check
          %p266 = pneg %p148
        $region26: #{tpu_custom_call.1} parent=11 // pred_check_branch
          %268 = sbr.rel (%p266) target = $region28
        $region27: #{tpu_custom_call.1} parent=11 // pred_region
          _
        $region28: #{tpu_custom_call.1} parent=11 // pred_fallthru
          _
      $region12: #{tpu_custom_call.1} parent=5 // pred_fallthru
        _
      %p269 = scmp.lt.s32.totalorder %s24, 2
      // Predicated region
      $region29: #{tpu_custom_call.1} parent=5 // pred_check
        %p270 = pneg %p269
      $region30: #{tpu_custom_call.1} parent=5 // pred_check_branch
        %272 = sbr.rel (%p270) target = $region32
      $region31: #{tpu_custom_call.1} parent=5 // pred_region
        // Predicated region
        $region33: #{tpu_custom_call.1} parent=31 // pred_check
          %p273 = pneg %p58
        $region34: #{tpu_custom_call.1} parent=31 // pred_check_branch
          %275 = sbr.rel (%p273) target = $region36
        $region35: #{tpu_custom_call.1} parent=31 // pred_region
          %s276 = sand.u32 %s48, 1
          %s277 = scalar_lea.sflag [#allocation3], %s276
          %s278 = sand.u32 %s48, 1
          %s279 = smul.addr %s278, 16
          %s280 = scalar_lea.vmem [#allocation2], %s279
          %s281 = smul.u32 2, %s32
          %s283 = ssub.s32 256, 256
          %284 = vsyncadd %s277, %s283
          %s285 = smul.addr %s31, 2
          %s286 = sadd.s32 %s281, %s285
          %s287 = smul.addr %s286, 128
          %s288 = scalar_lea.hbm %s0, %s287
          %s289 = sshll.u32 %s280, 4
          %s290 = int_to_ptr.vmem [resolvable:$true] %s289
          %295 = dma.hbm_to_vmem [thread:$0]  %s288, 256, %s290, %s277, 128, 128, 8
        $region36: #{tpu_custom_call.1} parent=31 // pred_fallthru
          _
      $region32: #{tpu_custom_call.1} parent=5 // pred_fallthru
        _
      %p296 = scmp.le.s32.totalorder 1, %s24
      %p297 = scmp.lt.s32.totalorder %s24, 3
      %p298 = pnand %p296, %p297
      %p299 = pneg %p298
      // Predicated region
      $region37: #{tpu_custom_call.1} parent=5 // pred_check
        _
      $region38: #{tpu_custom_call.1} parent=5 // pred_check_branch
        %301 = sbr.rel (%p298) target = $region40
      $region39: #{tpu_custom_call.1} parent=5 // pred_region
        %s302 = ssub.s32 %s24, 1
        %s303 = sand.u32 %s51, 1
        %s304 = scalar_lea.sflag [#allocation3], %s303
        %s305 = sand.u32 %s51, 1
        %s306 = smul.addr %s305, 16
        %s307 = scalar_lea.vmem [#allocation2], %s306
        // Predicated region
        $region41: #{tpu_custom_call.1} parent=39 // pred_check
          %p308 = pneg %p64
        $region42: #{tpu_custom_call.1} parent=39 // pred_check_branch
          %310 = sbr.rel (%p308) target = $region44
        $region43: #{tpu_custom_call.1} parent=39 // pred_region
          %311 = dma.done %s304, 256
        $region44: #{tpu_custom_call.1} parent=39 // pred_fallthru
          _
        // Predicated region
        $region45: #{tpu_custom_call.1} parent=39 // pred_check
          %p312 = pneg %p127
        $region46: #{tpu_custom_call.1} parent=39 // pred_check_branch
          %314 = sbr.rel (%p312) target = $region48
        $region47: #{tpu_custom_call.1} parent=39 // pred_region
          %315 = dma.done [#allocation6], 3072
        $region48: #{tpu_custom_call.1} parent=39 // pred_fallthru
          _
        %s316 = sand.u32 %s51, 1
        %s317 = scalar_lea.sflag [#allocation3], %s316
        %s318 = sand.u32 %s51, 1
        %s319 = smul.addr %s318, 16
        %s320 = scalar_lea.vmem [#allocation2], %s319
        %p321 = pneg %p64
        %p322 = pneg %p61
        %p323 = pneg %p85
        %p324 = pneg %p82
        %p325 = pneg %p106
        %p326 = pneg %p103
        %p327 = pneg %p127
        %p328 = pneg %p124
        %p329 = pneg %p148
        %p330 = pneg %p145
        %p331 = pneg %p176
        %p332 = pneg %p173
        %s333 = sand.u32 %s163, 1
        %s334 = scalar_lea.sflag [#allocation4], %s333
        %s335 = sand.u32 %s163, 1
        %s336 = smul.addr %s335, 8
        %s337 = scalar_lea.vmem [#allocation7], %s336
        %p338 = pneg %p204
        %p339 = pneg %p201
        %s340 = sand.u32 %s29, 1
        %s341 = scalar_lea.sflag [#allocation9], %s340
        %s342 = sand.u32 %s191, 1
        %s343 = smul.addr %s342, 8
        %s344 = scalar_lea.vmem [#allocation8], %s343
        %p345 = pneg %p232
        %p346 = pneg %p229
        %s347 = sand.u32 %s29, 1
        %s348 = scalar_lea.sflag [#allocation9], %s347
        %s349 = sand.u32 %s219, 1
        %s350 = smul.addr %s349, 8
        %s351 = scalar_lea.vmem [#allocation10], %s350
        %s352 = smul.u32 2, %s34
        %s353 = smul.u32 2, %s34
        %s354 = smul.u32 2, %s34
        %s355 = smul.u32 2, %s34
        %v357 = vld [vmem:[%s307] sm:$0xff]
        %v358 = vld [vmem:[%s307 + $0x8] sm:$0xff]
        %v359 = vld [vmem:[%s1] sm:$0x1]
        %v360 = vld [vmem:[%s2] sm:$0x1]
        %361 = vadd.xlane.f32.xlu0 %v357
        %v362 = vpop.xlane.xlu0 %361
        %363 = vadd.xlane.f32.xlu0 %v358
        %v364 = vpop.xlane.xlu0 %363
        %v365 = vrcp.pop 128.0
        %v366 = vmul.f32 %v362, %v365
        %v367 = vmul.f32 %v364, %v365
        %v368 = vsub.f32 %v357, %v366
        %v369 = vsub.f32 %v358, %v367
        %v370 = vmul.f32 %v368, %v368
        %v371 = vmul.f32 %v369, %v369
        %372 = vadd.xlane.f32.xlu0 %v370
        %v373 = vpop.xlane.xlu0 %372
        %374 = vadd.xlane.f32.xlu0 %v371
        %v375 = vpop.xlane.xlu0 %374
        %v376 = vmul.f32 %v373, %v365
        %v377 = vmul.f32 %v375, %v365
        %v378 = vadd.f32 %v376, 1e-05
        %v379 = vadd.f32 %v377, 1e-05
        %v380 = vrsqrt.pop %v378
        %v381 = vrsqrt.pop %v379
        %v382 = vmul.f32 %v368, %v380
        %v383 = vmul.f32 %v369, %v381
        %v385 = vlaneseq
        %v386 = vshrl.u32 %v385, 7
        %v387 = vsub.s32 0, %v386
        %v388 = vrot.slane %v359, %v387
        %v390 = vmul.f32 %v382, %v388
        %v391 = vmul.f32 %v383, %v388
        %v393 = vlaneseq
        %v394 = vshrl.u32 %v393, 7
        %v395 = vsub.s32 0, %v394
        %v396 = vrot.slane %v360, %v395
        %v398 = vadd.f32 %v390, %v396
        %v399 = vadd.f32 %v391, %v396
        %v400 = vpack.c.bf16 %v399, %v398
        %v401 = vld [vmem:[#allocation5] sm:$0xff]
        %v402 = vld [vmem:[#allocation5 + $0x8] sm:$0xf]
        %v403 = vld [vmem:[#allocation5 + $0xc] sm:$0xff]
        %v404 = vld [vmem:[#allocation5 + $0x14] sm:$0xf]
        %v405 = vld [vmem:[#allocation5 + $0x18] sm:$0xff]
        %v406 = vld [vmem:[#allocation5 + $0x20] sm:$0xf]
        %v407 = vld [vmem:[#allocation5 + $0x24] sm:$0xff]
        %v408 = vld [vmem:[#allocation5 + $0x2c] sm:$0xf]
        %v409 = vld [vmem:[#allocation5 + $0x30] sm:$0xff]
        %v410 = vld [vmem:[#allocation5 + $0x38] sm:$0xf]
        %v411 = vld [vmem:[#allocation5 + $0x3c] sm:$0xff]
        %v412 = vld [vmem:[#allocation5 + $0x44] sm:$0xf]
        %v413 = vld [vmem:[#allocation5 + $0x48] sm:$0xff]
        %v414 = vld [vmem:[#allocation5 + $0x50] sm:$0xf]
        %v415 = vld [vmem:[#allocation5 + $0x54] sm:$0xff]
        %v416 = vld [vmem:[#allocation5 + $0x5c] sm:$0xf]
        %v417 = vld [vmem:[#allocation5 + $0x60] sm:$0xff]
        %v418 = vld [vmem:[#allocation5 + $0x68] sm:$0xf]
        %v419 = vld [vmem:[#allocation5 + $0x6c] sm:$0xff]
        %v420 = vld [vmem:[#allocation5 + $0x74] sm:$0xf]
        %v421 = vld [vmem:[#allocation5 + $0x78] sm:$0xff]
        %v422 = vld [vmem:[#allocation5 + $0x80] sm:$0xf]
        %v423 = vld [vmem:[#allocation5 + $0x84] sm:$0xff]
        %v424 = vld [vmem:[#allocation5 + $0x8c] sm:$0xf]
        %v425 = vld [vmem:[#allocation5 + $0x90] sm:$0xff]
        %v426 = vld [vmem:[#allocation5 + $0x98] sm:$0xf]
        %v427 = vld [vmem:[#allocation5 + $0x9c] sm:$0xff]
        %v428 = vld [vmem:[#allocation5 + $0xa4] sm:$0xf]
        %v429 = vld [vmem:[#allocation5 + $0xa8] sm:$0xff]
        %v430 = vld [vmem:[#allocation5 + $0xb0] sm:$0xf]
        %v431 = vld [vmem:[#allocation5 + $0xb4] sm:$0xff]
        %v432 = vld [vmem:[#allocation5 + $0xbc] sm:$0xf]
        %v433 = vld [vmem:[%s4] sm:$0x7]
        %v435 = vlaneseq
        %v436 = vshrl.u32 %v435, 7
        %v437 = vsub.s32 0, %v436
        %v438 = vrot.slane %v433, %v437
        %v439 = vlaneseq
        %v440 = vshrl.u32 %v439, 7
        %v441 = vsub.s32 1, %v440
        %v442 = vrot.slane %v433, %v441
        %v443 = vlaneseq
        %v444 = vshrl.u32 %v443, 7
        %v445 = vsub.s32 2, %v444
        %v446 = vrot.slane %v433, %v445
        %v482 = vunpack.c.l.b16 %v401
        %v483 = vunpack.c.h.b16 %v401
        %v484 = vunpack.c.l.b16 %v402
        %v485 = vunpack.c.l.b16 %v403
        %v486 = vunpack.c.h.b16 %v403
        %v487 = vunpack.c.l.b16 %v404
        %v488 = vunpack.c.l.b16 %v405
        %v489 = vunpack.c.h.b16 %v405
        %v490 = vunpack.c.l.b16 %v406
        %v491 = vunpack.c.l.b16 %v407
        %v492 = vunpack.c.h.b16 %v407
        %v493 = vunpack.c.l.b16 %v408
        %v494 = vunpack.c.l.b16 %v409
        %v495 = vunpack.c.h.b16 %v409
        %v496 = vunpack.c.l.b16 %v410
        %v497 = vunpack.c.l.b16 %v411
        %v498 = vunpack.c.h.b16 %v411
        %v499 = vunpack.c.l.b16 %v412
        %v500 = vunpack.c.l.b16 %v413
        %v501 = vunpack.c.h.b16 %v413
        %v502 = vunpack.c.l.b16 %v414
        %v503 = vunpack.c.l.b16 %v415
        %v504 = vunpack.c.h.b16 %v415
        %v505 = vunpack.c.l.b16 %v416
        %v506 = vunpack.c.l.b16 %v417
        %v507 = vunpack.c.h.b16 %v417
        %v508 = vunpack.c.l.b16 %v418
        %v509 = vunpack.c.l.b16 %v419
        %v510 = vunpack.c.h.b16 %v419
        %v511 = vunpack.c.l.b16 %v420
        %v512 = vunpack.c.l.b16 %v421
        %v513 = vunpack.c.h.b16 %v421
        %v514 = vunpack.c.l.b16 %v422
        %v515 = vunpack.c.l.b16 %v423
        %v516 = vunpack.c.h.b16 %v423
        %v517 = vunpack.c.l.b16 %v424
        %v518 = vunpack.c.l.b16 %v425
        %v519 = vunpack.c.h.b16 %v425
        %v520 = vunpack.c.l.b16 %v426
        %v521 = vunpack.c.l.b16 %v427
        %v522 = vunpack.c.h.b16 %v427
        %v523 = vunpack.c.l.b16 %v428
        %v524 = vunpack.c.l.b16 %v429
        %v525 = vunpack.c.h.b16 %v429
        %v526 = vunpack.c.l.b16 %v430
        %v527 = vunpack.c.l.b16 %v431
        %v528 = vunpack.c.h.b16 %v431
        %v529 = vunpack.c.l.b16 %v432
        %v530 = vpack.c.b16 %v485, %v482
        %v531 = vpack.c.b16 %v486, %v483
        %v532 = vpack.c.b16 %v487, %v484
        %v533 = vpack.c.b16 %v491, %v488
        %v534 = vpack.c.b16 %v492, %v489
        %v535 = vpack.c.b16 %v493, %v490
        %v536 = vpack.c.b16 %v497, %v494
        %v537 = vpack.c.b16 %v498, %v495
        %v538 = vpack.c.b16 %v499, %v496
        %v539 = vpack.c.b16 %v503, %v500
        %v540 = vpack.c.b16 %v504, %v501
        %v541 = vpack.c.b16 %v505, %v502
        %v542 = vpack.c.b16 %v509, %v506
        %v543 = vpack.c.b16 %v510, %v507
        %v544 = vpack.c.b16 %v511, %v508
        %v545 = vpack.c.b16 %v515, %v512
        %v546 = vpack.c.b16 %v516, %v513
        %v547 = vpack.c.b16 %v517, %v514
        %v548 = vpack.c.b16 %v521, %v518
        %v549 = vpack.c.b16 %v522, %v519
        %v550 = vpack.c.b16 %v523, %v520
        %v551 = vpack.c.b16 %v527, %v524
        %v552 = vpack.c.b16 %v528, %v525
        %v553 = vpack.c.b16 %v529, %v526
        %578 = vmatprep.subr.bf16.mxu0 %v552
        %579 = vmatpush1.bf16.msra.mxu0 %v551
        %580 = vmatprep.subr.bf16.mxu0 %v549
        %581 = vmatpush1.bf16.msra.mxu0 %v548
        %582 = vmatprep.subr.bf16.mxu0 %v546
        %583 = vmatpush1.bf16.msra.mxu0 %v545
        %584 = vmatprep.subr.bf16.mxu0 %v543
        %585 = vmatpush1.bf16.msra.mxu0 %v542
        %586 = vmatprep.subr.bf16.mxu0 %v540
        %587 = vmatpush1.bf16.msra.mxu0 %v539
        %588 = vmatprep.subr.bf16.mxu0 %v537
        %589 = vmatpush1.bf16.msra.mxu0 %v536
        %590 = vmatprep.subr.bf16.mxu0 %v534
        %591 = vmatpush1.bf16.msra.mxu0 %v533
        %592 = vmatprep.subr.bf16.mxu0 %v531
        %593 = vmatpush1.bf16.msra.mxu0 %v530
        %594 = vmatprep.subr.bf16.mxu0 0
        %595 = vmatpush2.bf16.msra.mxu0 0
        %596 = vmatprep.subr.bf16.mxu0 0
        %597 = vmatpush2.bf16.msra.mxu0 0
        %598 = vmatprep.subr.bf16.mxu0 0
        %599 = vmatpush2.bf16.msra.mxu0 0
        %600 = vmatprep.subr.bf16.mxu0 0
        %601 = vmatpush2.bf16.msra.mxu0 0
        %602 = vmatprep.subr.bf16.mxu0 0
        %603 = vmatpush2.bf16.msra.mxu0 0
        %604 = vmatprep.subr.bf16.mxu0 0
        %605 = vmatpush2.bf16.msra.mxu0 0
        %606 = vmatprep.subr.bf16.mxu0 0
        %607 = vmatpush2.bf16.msra.mxu0 0
        %608 = vmatprep.subr.bf16.mxu0 0
        %609 = vmatpush2.bf16.msra.mxu0 0
        %610 = vmatprep.mubr.bf16.mxu0 0
        %611 = vmatmul.mubr.bf16.gmra.mxu0 %v400
        %v612 = vpop.f32.mrf.mxu0
        %v613 = vadd.f32 %v438, %v612
        %v614 = vpop.f32.mrf.mxu0
        %v615 = vadd.f32 %v442, %v614
        %v616 = vpop.f32.mrf.mxu0
        %v617 = vadd.f32 %v438, %v616
        %v618 = vpop.f32.mrf.mxu0
        %v619 = vadd.f32 %v442, %v618
        %620 = vdwg.mxu0
        %621 = vmatprep.subr.bf16.mxu0 0
        %622 = vmatpush1.bf16.msra.mxu0 %v553
        %623 = vmatprep.subr.bf16.mxu0 0
        %624 = vmatpush1.bf16.msra.mxu0 %v550
        %625 = vmatprep.subr.bf16.mxu0 0
        %626 = vmatpush1.bf16.msra.mxu0 %v547
        %627 = vmatprep.subr.bf16.mxu0 0
        %628 = vmatpush1.bf16.msra.mxu0 %v544
        %629 = vmatprep.subr.bf16.mxu0 0
        %630 = vmatpush1.bf16.msra.mxu0 %v541
        %631 = vmatprep.subr.bf16.mxu0 0
        %632 = vmatpush1.bf16.msra.mxu0 %v538
        %633 = vmatprep.subr.bf16.mxu0 0
        %634 = vmatpush1.bf16.msra.mxu0 %v535
        %635 = vmatprep.subr.bf16.mxu0 0
        %636 = vmatpush1.bf16.msra.mxu0 %v532
        %637 = vmatprep.subr.bf16.mxu0 0
        %638 = vmatpush2.bf16.msra.mxu0 0
        %639 = vmatprep.subr.bf16.mxu0 0
        %640 = vmatpush2.bf16.msra.mxu0 0
        %641 = vmatprep.subr.bf16.mxu0 0
        %642 = vmatpush2.bf16.msra.mxu0 0
        %643 = vmatprep.subr.bf16.mxu0 0
        %644 = vmatpush2.bf16.msra.mxu0 0
        %645 = vmatprep.subr.bf16.mxu0 0
        %646 = vmatpush2.bf16.msra.mxu0 0
        %647 = vmatprep.subr.bf16.mxu0 0
        %648 = vmatpush2.bf16.msra.mxu0 0
        %649 = vmatprep.subr.bf16.mxu0 0
        %650 = vmatpush2.bf16.msra.mxu0 0
        %651 = vmatprep.subr.bf16.mxu0 0
        %652 = vmatpush2.bf16.msra.mxu0 0
        %653 = vmatprep.mubr.bf16.mxu0 0
        %654 = vmatmul.mubr.bf16.gmra.mxu0 %v400
        %v655 = vpop.f32.mrf.mxu0
        %v656 = vadd.f32 %v446, %v655
        %v657 = vpop.f32.mrf.mxu0
        %v658 = vpop.f32.mrf.mxu0
        %v659 = vadd.f32 %v446, %v658
        %v660 = vpop.f32.mrf.mxu0
        %661 = vdwg.mxu0
        %v662 = vpack.c.bf16 %v617, %v613
        %v663 = vpack.c.bf16 %v619, %v615
        %v664 = vpack.c.bf16 %v659, %v656
        %v666 = vunpack.c.l.b16 %v662
        %v667 = vunpack.c.h.b16 %v662
        %v668 = vpack.c.b16 %v666, %v666
        %v669 = vpack.c.b16 %v667, %v667
        %672 = vst [vmem:[%s337] sm:$0xf] %v668
        %673 = vst [vmem:[%s337 + $0x4] sm:$0xf] %v669
        %v675 = vunpack.c.l.b16 %v663
        %v676 = vunpack.c.h.b16 %v663
        %v677 = vpack.c.b16 %v675, %v675
        %v678 = vpack.c.b16 %v676, %v676
        %681 = vst [vmem:[%s344] sm:$0xf] %v677
        %682 = vst [vmem:[%s344 + $0x4] sm:$0xf] %v678
        %v684 = vunpack.c.l.b16 %v664
        %v685 = vunpack.c.h.b16 %v664
        %v686 = vpack.c.b16 %v684, %v684
        %v687 = vpack.c.b16 %v685, %v685
        %690 = vst [vmem:[%s351] sm:$0xf] %v686
        %691 = vst [vmem:[%s351 + $0x4] sm:$0xf] %v687
        %s692 = sand.u32 %s163, 1
        %s693 = scalar_lea.sflag [#allocation4], %s692
        %s694 = sand.u32 %s163, 1
        %s695 = smul.addr %s694, 8
        %s696 = scalar_lea.vmem [#allocation7], %s695
        %s697 = sand.u32 %s29, 1
        %s698 = scalar_lea.sflag [#allocation9], %s697
        %s699 = sand.u32 %s191, 1
        %s700 = smul.addr %s699, 8
        %s701 = scalar_lea.vmem [#allocation8], %s700
        %s702 = sand.u32 %s29, 1
        %s703 = scalar_lea.sflag [#allocation9], %s702
        %s704 = sand.u32 %s219, 1
        %s705 = smul.addr %s704, 8
        %s706 = scalar_lea.vmem [#allocation10], %s705
        // Predicated region
        $region49: #{tpu_custom_call.1} parent=39 // pred_check
          %p707 = pneg %p173
        $region50: #{tpu_custom_call.1} parent=39 // pred_check_branch
          %709 = sbr.rel (%p707) target = $region52
        $region51: #{tpu_custom_call.1} parent=39 // pred_region
          %s710 = smul.u32 2, %s34
          %s712 = ssub.s32 128, 128
          %713 = vsyncadd %s693, %s712
          %s714 = smul.addr %s33, 2
          %s715 = sadd.s32 %s710, %s714
          %s716 = smul.addr %s715, 64
          %s717 = scalar_lea.hbm %s5, %s716
          %s718 = sshll.u32 %s696, 4
          %s719 = int_to_ptr.vmem [resolvable:$true] %s718
          %724 = dma.vmem_to_hbm [thread:$0]  %s719, 128, %s717, %s693, 64, 64, 4
        $region52: #{tpu_custom_call.1} parent=39 // pred_fallthru
          _
        // Predicated region
        $region53: #{tpu_custom_call.1} parent=39 // pred_check
          %p725 = pneg %p201
        $region54: #{tpu_custom_call.1} parent=39 // pred_check_branch
          %727 = sbr.rel (%p725) target = $region56
        $region55: #{tpu_custom_call.1} parent=39 // pred_region
          %s728 = smul.u32 2, %s34
          %s730 = ssub.s32 128, 128
          %731 = vsyncadd %s698, %s730
          %s732 = smul.addr %s33, 2
          %s733 = sadd.s32 %s728, %s732
          %s734 = smul.addr %s733, 64
          %s735 = scalar_lea.hbm %s6, %s734
          %s736 = sshll.u32 %s701, 4
          %s737 = int_to_ptr.vmem [resolvable:$true] %s736
          %742 = dma.vmem_to_hbm [thread:$0]  %s737, 128, %s735, %s698, 64, 64, 4
        $region56: #{tpu_custom_call.1} parent=39 // pred_fallthru
          _
        // Predicated region
        $region57: #{tpu_custom_call.1} parent=39 // pred_check
          %p743 = pneg %p229
        $region58: #{tpu_custom_call.1} parent=39 // pred_check_branch
          %745 = sbr.rel (%p743) target = $region60
        $region59: #{tpu_custom_call.1} parent=39 // pred_region
          %s746 = smul.u32 2, %s34
          %s748 = ssub.s32 128, 128
          %749 = vsyncadd %s703, %s748
          %s750 = smul.addr %s33, 2
          %s751 = sadd.s32 %s746, %s750
          %s752 = smul.addr %s751, 64
          %s753 = scalar_lea.hbm %s7, %s752
          %s754 = sshll.u32 %s706, 4
          %s755 = int_to_ptr.vmem [resolvable:$true] %s754
          %760 = dma.vmem_to_hbm [thread:$0]  %s755, 128, %s753, %s703, 64, 64, 4
        $region60: #{tpu_custom_call.1} parent=39 // pred_fallthru
          _
      $region40: #{tpu_custom_call.1} parent=5 // pred_fallthru
        _
      %p761 = scmp.le.s32.totalorder 2, %s24
      // Predicated region
      $region61: #{tpu_custom_call.1} parent=5 // pred_check
        %p762 = pneg %p761
      $region62: #{tpu_custom_call.1} parent=5 // pred_check_branch
        %764 = sbr.rel (%p762) target = $region64
      $region63: #{tpu_custom_call.1} parent=5 // pred_region
        %s765 = ssub.s32 %s24, 2
        // Predicated region
        $region65: #{tpu_custom_call.1} parent=63 // pred_check
          %p766 = pneg %p179
        $region66: #{tpu_custom_call.1} parent=63 // pred_check_branch
          %768 = sbr.rel (%p766) target = $region68
        $region67: #{tpu_custom_call.1} parent=63 // pred_region
          %s769 = sand.u32 %s164, 1
          %s770 = scalar_lea.sflag [#allocation4], %s769
          %s771 = sand.u32 %s164, 1
          %s772 = smul.addr %s771, 8
          %s773 = scalar_lea.vmem [#allocation7], %s772
          %774 = dma.done %s770, 128
        $region68: #{tpu_custom_call.1} parent=63 // pred_fallthru
          _
        // Predicated region
        $region69: #{tpu_custom_call.1} parent=63 // pred_check
          %p775 = pneg %p207
        $region70: #{tpu_custom_call.1} parent=63 // pred_check_branch
          %777 = sbr.rel (%p775) target = $region72
        $region71: #{tpu_custom_call.1} parent=63 // pred_region
          %s778 = sand.u32 %s30, 1
          %s779 = scalar_lea.sflag [#allocation9], %s778
          %s780 = sand.u32 %s192, 1
          %s781 = smul.addr %s780, 8
          %s782 = scalar_lea.vmem [#allocation8], %s781
          %783 = dma.done %s779, 128
        $region72: #{tpu_custom_call.1} parent=63 // pred_fallthru
          _
        // Predicated region
        $region73: #{tpu_custom_call.1} parent=63 // pred_check
          %p784 = pneg %p235
        $region74: #{tpu_custom_call.1} parent=63 // pred_check_branch
          %786 = sbr.rel (%p784) target = $region76
        $region75: #{tpu_custom_call.1} parent=63 // pred_region
          %s787 = sand.u32 %s30, 1
          %s788 = scalar_lea.sflag [#allocation9], %s787
          %s789 = sand.u32 %s220, 1
          %s790 = smul.addr %s789, 8
          %s791 = scalar_lea.vmem [#allocation10], %s790
          %792 = dma.done %s788, 128
        $region76: #{tpu_custom_call.1} parent=63 // pred_fallthru
          _
      $region64: #{tpu_custom_call.1} parent=5 // pred_fallthru
        _
    $region6: #{tpu_custom_call.1} parent=1 // loop_footer
      %s28 = sadd.s32 1, %s24
    $region7: #{tpu_custom_call.1} parent=1 // loop_footer_branch
      %23 = sbr.rel target = $region3
    $region8: #{tpu_custom_call.1} parent=1 // loop_exit
      _
    %793 = vsyncpa [#allocation3], 1
    %s794 = scalar_lea.sflag [#allocation3], 1
    %795 = vsyncpa %s794, 1
    %796 = vsyncpa [#allocation6], 1
    %797 = vsyncpa [#allocation4], 1
    %s798 = scalar_lea.sflag [#allocation4], 1
    %799 = vsyncpa %s798, 1
    %800 = vsyncpa [#allocation9], 1
    %s801 = scalar_lea.sflag [#allocation9], 1
    %802 = vsyncpa %s801, 1

</llo_original>
